<compile_context>
chip_gen: v7x
topology: tpu7x:2x2x1
jax: 0.10.0
libtpu: 0.0.40
codegen_flags: <defaults>
</compile_context>

<pallas_src>
import numpy as np
import jax
import jax.numpy as jnp
from jax.experimental import pallas as pl
from jax.experimental.pallas import tpu as pltpu


# ---------------------------------------------------------------------------
# Separable bicubic interpolation matrix (exact PyTorch math)
# ---------------------------------------------------------------------------
def _cubic_conv1(x, A):
    return ((A + 2.0) * x - (A + 3.0)) * x * x + 1.0


def _cubic_conv2(x, A):
    return ((A * x - 5.0 * A) * x + 8.0 * A) * x - 4.0 * A


def bicubic_weight_matrix(in_size: int, out_size: int, scale: float,
                          A: float = -0.75) -> np.ndarray:
    """W of shape (out_size, in_size) s.t. out = W @ in (1-D bicubic,
    align_corners=False, PyTorch tap-clamping at the borders)."""
    W = np.zeros((out_size, in_size), dtype=np.float64)
    for o in range(out_size):
        src = (o + 0.5) / scale - 0.5          # half-pixel centers
        i0 = int(np.floor(src))
        t = src - i0
        coeffs = [
            _cubic_conv2(t + 1.0, A),
            _cubic_conv1(t, A),
            _cubic_conv1(1.0 - t, A),
            _cubic_conv2(2.0 - t, A),
        ]
        for k, c in enumerate(coeffs):
            idx = min(max(i0 - 1 + k, 0), in_size - 1)   # clamp border taps
            W[o, idx] += c
    return W.astype(np.float32)


# ---------------------------------------------------------------------------
# Helpers: plane batching and VMEM budget
# ---------------------------------------------------------------------------
def _pick_plane_batch(nc: int, h: int) -> int:
    """Pick how many planes to stack per grid step.

    Keep B*H <= 512 (bounds the block-diagonal height weight), cap B at 8,
    require B | nc, and prefer >= 2 grid steps so both v7x TensorCores get
    work under the "parallel" grid axis.
    """
    cap = max(1, min(512 // max(h, 1), 8, nc))
    b = 1
    for d in range(1, cap + 1):
        if nc % d == 0:
            b = d
    if b == nc and nc > 1:
        for d in range(b // 2, 0, -1):
            if nc % d == 0:
                b = d
                break
    return b


def _vmem_limit_bytes() -> int:
    """Raise the scoped VMEM limit above the conservative default while
    staying well inside every generation's physical VMEM (64 MiB on v7x)."""
    try:
        cap = pltpu.get_tpu_info().vmem_capacity_bytes
        return int(min(cap * 3 // 4, 96 << 20))
    except Exception:
        return 48 << 20


# ---------------------------------------------------------------------------
# Pallas kernel: per plane-group, out = blockdiag(Wh) @ (x_rows @ Ww^T) on MXU
# ---------------------------------------------------------------------------
def _bicubic_kernel(x_ref, wwt_ref, whbd_ref, o_ref):
    # x_ref:    (B*H, W)        stacked rows of B planes
    # wwt_ref:  (W, W_out)      width-pass weights (transposed)
    # whbd_ref: (B*H_out, B*H)  blockdiag_B(height-pass weights)
    # o_ref:    (B*H_out, W_out)
    c = jnp.dot(x_ref[...], wwt_ref[...],
                preferred_element_type=jnp.float32)        # (B*H, W_out)
    out = jnp.dot(whbd_ref[...], c,
                  preferred_element_type=jnp.float32)      # (B*H_out, W_out)
    # Note: default MXU precision; pass precision=lax.Precision.HIGHEST to both
    # dots if bit-close parity with PyTorch CPU is required.
    o_ref[...] = out.astype(o_ref.dtype)


def bicubic_upsample(x: jax.Array, scale_factor: int = 4) -> jax.Array:
    """x: (N, C, H, W) float32 -> (N, C, H*s, W*s) float32."""
    N, C, H, W = x.shape
    s = int(scale_factor)
    H_out, W_out = H * s, W * s
    NC = N * C

    B = _pick_plane_batch(NC, H)                 # planes per grid step
    G = NC // B                                  # grid steps

    # Weights (boundary clamping baked in).
    wh = bicubic_weight_matrix(H, H_out, float(s))            # (H_out, H)
    wwt = bicubic_weight_matrix(W, W_out, float(s)).T         # (W, W_out)
    whbd = np.kron(np.eye(B, dtype=np.float32), wh)           # (B*H_out, B*H)
    wwt_j = jnp.asarray(wwt)
    whbd_j = jnp.asarray(whbd)

    # Pure contiguous reshape (no copy): rows of all NC planes stacked.
    x_rows = x.reshape(NC * H, W)

    cost = pl.CostEstimate(
        flops=2 * G * (B * H * W * W_out + (B * H_out) * (B * H) * W_out),
        transcendentals=0,
        bytes_accessed=4 * (NC * H * W + W * W_out
                            + (B * H_out) * (B * H) + NC * H_out * W_out),
    )

    out_rows = pl.pallas_call(
        _bicubic_kernel,
        out_shape=jax.ShapeDtypeStruct((NC * H_out, W_out), x.dtype),
        grid_spec=pltpu.PrefetchScalarGridSpec(
            num_scalar_prefetch=0,
            grid=(G,),
            in_specs=[
                pl.BlockSpec((B * H, W), lambda g: (g, 0)),
                # Constant index_maps: the weight operands are DMA'd once.
                pl.BlockSpec((W, W_out), lambda g: (0, 0)),
                pl.BlockSpec((B * H_out, B * H), lambda g: (0, 0)),
            ],
            out_specs=pl.BlockSpec((B * H_out, W_out), lambda g: (g, 0)),
        ),
        compiler_params=pltpu.CompilerParams(
            dimension_semantics=("parallel",),
            vmem_limit_bytes=_vmem_limit_bytes(),
        ),
        cost_estimate=cost,
    )(x_rows, wwt_j, whbd_j)

    # Pure contiguous reshape back to NCHW (no copy).
    return out_rows.reshape(N, C, H_out, W_out)
    # TODO(synk): for very large planes (H, W >~ 512) add a second grid axis
    # tiling the output rows (H_out) so a single output block stays well inside
    # v7x's 64 MiB VMEM.


if __name__ == "__main__":
    key = jax.random.PRNGKey(0)
    x = jax.random.normal(key, (2, 4, 16, 16), dtype=jnp.float32)

    out = bicubic_upsample(x, scale_factor=4)
    out = jax.block_until_ready(out)

    assert out.shape == (2, 4, 64, 64), out.shape
    assert out.dtype == jnp.float32
    assert bool(jnp.all(jnp.isfinite(out)))

    # Sanity check against a plain-JAX evaluation of the same separable
    # weights (generous tol: MXU default precision uses bf16 passes).
    wh = jnp.asarray(bicubic_weight_matrix(16, 64, 4.0))
    wwt = jnp.asarray(bicubic_weight_matrix(16, 64, 4.0).T)
    ref = jnp.einsum('oh,nchw->ncow', wh, x)
    ref = jnp.einsum('ncow,wp->ncop', ref, wwt)
    assert float(jnp.max(jnp.abs(out - ref))) < 0.1

    print("KERNEL_OK")
</pallas_src>

<mosaic_0001>
module attributes {stable_mosaic.version = 11 : i64} {
  func.func @_bicubic_kernel(%arg0: i32, %arg1: memref<64x16xf32, #tpu.memory_space<vmem>>, %arg2: memref<16x64xf32, #tpu.memory_space<vmem>>, %arg3: memref<256x64xf32, #tpu.memory_space<vmem>>, %arg4: memref<256x64xf32, #tpu.memory_space<vmem>>) attributes {dimension_semantics = [#tpu.dimension_semantics<parallel>], iteration_bounds = array<i64: 2>, scalar_prefetch = 0 : i64, scratch_operands = 0 : i64, tpu.core_type = #tpu.core_type<tc>, window_params = [{transform_indices = @transform_0, window_bounds = array<i64: 64, 16>}, {pipeline_mode = #tpu.pipeline_mode<synchronous>, transform_indices = @transform_1, window_bounds = array<i64: 16, 64>}, {pipeline_mode = #tpu.pipeline_mode<synchronous>, transform_indices = @transform_2, window_bounds = array<i64: 256, 64>}, {transform_indices = @transform_3, window_bounds = array<i64: 256, 64>}]} {
    %c0 = arith.constant 0 : index
    %c0_0 = arith.constant 0 : index
    %0 = vector.load %arg1[%c0, %c0_0] : memref<64x16xf32, #tpu.memory_space<vmem>>, vector<64x16xf32>
    %c0_1 = arith.constant 0 : index
    %c0_2 = arith.constant 0 : index
    %1 = vector.load %arg2[%c0_1, %c0_2] : memref<16x64xf32, #tpu.memory_space<vmem>>, vector<16x64xf32>
    %cst = arith.constant dense<0.000000e+00> : vector<64x64xf32>
    %2 = tpu.matmul %0, %1, %cst {dimension_numbers = #tpu.dot_dimension_numbers<[1], [0], [0], [1], [0, 0, 1, 1], [], []>} : vector<64x16xf32>, vector<16x64xf32>, vector<64x64xf32> -> vector<64x64xf32>
    %c0_3 = arith.constant 0 : index
    %c0_4 = arith.constant 0 : index
    %3 = vector.load %arg3[%c0_3, %c0_4] : memref<256x64xf32, #tpu.memory_space<vmem>>, vector<256x64xf32>
    %cst_5 = arith.constant dense<0.000000e+00> : vector<256x64xf32>
    %4 = tpu.matmul %3, %2, %cst_5 {dimension_numbers = #tpu.dot_dimension_numbers<[1], [0], [0], [1], [0, 0, 1, 1], [], []>} : vector<256x64xf32>, vector<64x64xf32>, vector<256x64xf32> -> vector<256x64xf32>
    %c0_6 = arith.constant 0 : index
    %c0_7 = arith.constant 0 : index
    %5 = vector.load %arg4[%c0_6, %c0_7] : memref<256x64xf32, #tpu.memory_space<vmem>>, vector<256x64xf32>
    tpu.vector_store %arg4[%c0_6, %c0_7], %4 {strides = array<i32>} : memref<256x64xf32, #tpu.memory_space<vmem>>, vector<256x64xf32>,
    return
  }
  func.func @transform_0(%arg0: i32) -> (i32, i32) {
    %c0_i32 = arith.constant 0 : i32
    %c0_i32_0 = arith.constant 0 : i32
    return %arg0, %c0_i32 : i32, i32
  }
  func.func @transform_1(%arg0: i32) -> (i32, i32) {
    %c0_i32 = arith.constant 0 : i32
    %c0_i32_0 = arith.constant 0 : i32
    %c0_i32_1 = arith.constant 0 : i32
    return %c0_i32, %c0_i32_0 : i32, i32
  }
  func.func @transform_2(%arg0: i32) -> (i32, i32) {
    %c0_i32 = arith.constant 0 : i32
    %c0_i32_0 = arith.constant 0 : i32
    %c0_i32_1 = arith.constant 0 : i32
    return %c0_i32, %c0_i32_0 : i32, i32
  }
  func.func @transform_3(%arg0: i32) -> (i32, i32) {
    %c0_i32 = arith.constant 0 : i32
    %c0_i32_0 = arith.constant 0 : i32
    return %arg0, %c0_i32 : i32, i32
  }
}

</mosaic_0001>

<llo_original>
// kernel: tpu_custom_call.1
$region0: #{tpu_custom_call.1}
  #allocation0 [shape = 'u32[]', space=smem, size = 0x4, offset = 0x4, fixed_abs, tag = 'smem constant byte address 0x4 - core index']
  #allocation1 [shape = 'u32[144,128]{1,0:T(1,128)}', space=vmem, size = 0x12000, scoped, tag = 'internal scratch']
  %s0 = inlined_call_operand.vmem [shape: f32[128,16], index: 0, kind: input, shape index: {}]
  %s1 = inlined_call_operand.vmem [shape: f32[16,64], index: 1, kind: input, shape index: {}]
  %s2 = inlined_call_operand.vmem [shape: f32[256,64], index: 2, kind: input, shape index: {}]
  %s3 = inlined_call_operand.vmem [shape: f32[512,64], index: 3, kind: output, shape index: {}]
  %s4 = sld [smem:[#allocation0]]
  $region45: #{tpu_custom_call.1} parent=0
    _
  %s6 = ssub.s32 1, %s4
  %s7 = scalar_select 0, %s6, %s4
  loop: start=0, step=1, limit=4
  $region2: #{tpu_custom_call.1} parent=0 // loop_pre_header
    _
  $region3: #{tpu_custom_call.1} parent=0 // loop_header
    %s9 = sphi 0, %s13
    %p10 = scmp.ge.s32.totalorder %s9, 4
    %s19 = sphi 0, %s21
    %s22 = sphi 0, %s19
    %s23 = sphi 0, %s22
    %s39 = sphi 0, %s23
    %s43 = sphi 0, %s43
    %s45 = sphi 0, %s43
    %s46 = sphi 0, %s45
    %s60 = sphi 0, %s46
    %s64 = sphi 0, %s64
    %s66 = sphi 0, %s64
    %s67 = sphi 0, %s66
    %s81 = sphi 0, %s67
    %s87 = sphi 0, %s89
    %s90 = sphi 0, %s87
    %s91 = sphi 0, %s90
    %s107 = sphi 0, %s91
  $region4: #{tpu_custom_call.1} parent=0 // loop_header_branch
    %12 = sbr.rel (%p10) target = $region8
  $region5: #{tpu_custom_call.1} parent=0 // loop_body
    %s14 = ssub.s32 %s9, 1
    %s15 = ssub.s32 %s9, 2
    %s16 = sadd.s32 %s9, 1
    %s17 = ssub.s32 %s9, %s16
    %p18 = scmp.eq.s32.totalorder %s17, 0
    %s20 = sadd.s32 %s19, 1
    %s21 = scalar_select %p18, %s19, %s20
    %p24 = pneg %p18
    %p25 = scmp.eq.s32.totalorder %s9, 1
    %p26 = por %p24, %p25
    %p27 = scmp.ne.s32.totalorder %s19, %s22
    %p28 = scmp.eq.s32.totalorder %s9, 0
    %p29 = por %p27, %p28
    %p30 = scmp.ne.s32.totalorder %s19, %s22
    %p31 = scmp.eq.s32.totalorder %s14, 1
    %p32 = por %p30, %p31
    %p33 = scmp.ne.s32.totalorder %s22, %s23
    %p34 = scmp.eq.s32.totalorder %s14, 0
    %p35 = por %p33, %p34
    %p36 = scmp.ne.s32.totalorder %s22, %s23
    %p37 = scmp.eq.s32.totalorder %s15, 1
    %p38 = por %p36, %p37
    %p40 = scmp.ne.s32.totalorder %s23, %s39
    %p41 = scmp.eq.s32.totalorder %s15, 0
    %p42 = por %p40, %p41
    %s44 = sadd.s32 %s43, 1
    %p47 = scmp.eq.s32.totalorder %s9, 1
    %p48 = scmp.ne.s32.totalorder %s43, %s45
    %p49 = scmp.eq.s32.totalorder %s9, 0
    %p50 = por %p48, %p49
    %p51 = scmp.ne.s32.totalorder %s43, %s45
    %p52 = scmp.eq.s32.totalorder %s14, 1
    %p53 = por %p51, %p52
    %p54 = scmp.ne.s32.totalorder %s45, %s46
    %p55 = scmp.eq.s32.totalorder %s14, 0
    %p56 = por %p54, %p55
    %p57 = scmp.ne.s32.totalorder %s45, %s46
    %p58 = scmp.eq.s32.totalorder %s15, 1
    %p59 = por %p57, %p58
    %p61 = scmp.ne.s32.totalorder %s46, %s60
    %p62 = scmp.eq.s32.totalorder %s15, 0
    %p63 = por %p61, %p62
    %s65 = sadd.s32 %s64, 1
    %p68 = scmp.eq.s32.totalorder %s9, 1
    %p69 = scmp.ne.s32.totalorder %s64, %s66
    %p70 = scmp.eq.s32.totalorder %s9, 0
    %p71 = por %p69, %p70
    %p72 = scmp.ne.s32.totalorder %s64, %s66
    %p73 = scmp.eq.s32.totalorder %s14, 1
    %p74 = por %p72, %p73
    %p75 = scmp.ne.s32.totalorder %s66, %s67
    %p76 = scmp.eq.s32.totalorder %s14, 0
    %p77 = por %p75, %p76
    %p78 = scmp.ne.s32.totalorder %s66, %s67
    %p79 = scmp.eq.s32.totalorder %s15, 1
    %p80 = por %p78, %p79
    %p82 = scmp.ne.s32.totalorder %s67, %s81
    %p83 = scmp.eq.s32.totalorder %s15, 0
    %p84 = por %p82, %p83
    %s85 = ssub.s32 %s9, %s16
    %p86 = scmp.eq.s32.totalorder %s85, 0
    %s88 = sadd.s32 %s87, 1
    %s89 = scalar_select %p86, %s87, %s88
    %p92 = pneg %p86
    %p93 = scmp.eq.s32.totalorder %s9, 1
    %p94 = por %p92, %p93
    %p95 = scmp.ne.s32.totalorder %s87, %s90
    %p96 = scmp.eq.s32.totalorder %s9, 0
    %p97 = por %p95, %p96
    %p98 = scmp.ne.s32.totalorder %s87, %s90
    %p99 = scmp.eq.s32.totalorder %s14, 1
    %p100 = por %p98, %p99
    %p101 = scmp.ne.s32.totalorder %s90, %s91
    %p102 = scmp.eq.s32.totalorder %s14, 0
    %p103 = por %p101, %p102
    %p104 = scmp.ne.s32.totalorder %s90, %s91
    %p105 = scmp.eq.s32.totalorder %s15, 1
    %p106 = por %p104, %p105
    %p108 = scmp.ne.s32.totalorder %s91, %s107
    %p109 = scmp.eq.s32.totalorder %s15, 0
    %p110 = por %p108, %p109
    %p111 = scmp.le.s32.totalorder 1, %s9
    %p112 = scmp.lt.s32.totalorder %s9, 3
    %p113 = pnand %p111, %p112
    %p114 = pneg %p113
    // Predicated region
    $region9: #{tpu_custom_call.1} parent=5 // pred_check
      _
    $region10: #{tpu_custom_call.1} parent=5 // pred_check_branch
      %116 = sbr.rel (%p113) target = $region12
    $region11: #{tpu_custom_call.1} parent=5 // pred_region
      %s117 = ssub.s32 %s9, 1
      // Predicated region
      $region13: #{tpu_custom_call.1} parent=11 // pred_check
        %p118 = pneg %p56
      $region14: #{tpu_custom_call.1} parent=11 // pred_check_branch
        %120 = sbr.rel (%p118) target = $region16
      $region15: #{tpu_custom_call.1} parent=11 // pred_region
        _
      $region16: #{tpu_custom_call.1} parent=11 // pred_fallthru
        _
      // Predicated region
      $region17: #{tpu_custom_call.1} parent=11 // pred_check
        %p121 = pneg %p77
      $region18: #{tpu_custom_call.1} parent=11 // pred_check_branch
        %123 = sbr.rel (%p121) target = $region20
      $region19: #{tpu_custom_call.1} parent=11 // pred_region
        _
      $region20: #{tpu_custom_call.1} parent=11 // pred_fallthru
        _
    $region12: #{tpu_custom_call.1} parent=5 // pred_fallthru
      _
    %p124 = scmp.lt.s32.totalorder %s9, 2
    // Predicated region
    $region21: #{tpu_custom_call.1} parent=5 // pred_check
      %p125 = pneg %p124
    $region22: #{tpu_custom_call.1} parent=5 // pred_check_branch
      %127 = sbr.rel (%p125) target = $region24
    $region23: #{tpu_custom_call.1} parent=5 // pred_region
      // Predicated region
      $region25: #{tpu_custom_call.1} parent=23 // pred_check
        %p128 = pneg %p29
      $region26: #{tpu_custom_call.1} parent=23 // pred_check_branch
        %130 = sbr.rel (%p128) target = $region28
      $region27: #{tpu_custom_call.1} parent=23 // pred_region
        %s131 = smul.u32 8, %s9
        %p132 = scmp.lt.s32.totalorder %s131, 15
        %s133 = scalar_select %p132, %s131, 15
        %s134 = smul.addr %s133, 8
        %s135 = scalar_lea.vmem %s0, %s134
        %s136 = smul.u32 8, %s9
      $region28: #{tpu_custom_call.1} parent=23 // pred_fallthru
        _
    $region24: #{tpu_custom_call.1} parent=5 // pred_fallthru
      _
    %p137 = scmp.le.s32.totalorder 1, %s9
    %p138 = scmp.lt.s32.totalorder %s9, 3
    %p139 = pnand %p137, %p138
    %p140 = pneg %p139
    // Predicated region
    $region29: #{tpu_custom_call.1} parent=5 // pred_check
      _
    $region30: #{tpu_custom_call.1} parent=5 // pred_check_branch
      %142 = sbr.rel (%p139) target = $region32
    $region31: #{tpu_custom_call.1} parent=5 // pred_region
      %s143 = ssub.s32 %s9, 1
      %s144 = smul.u32 8, %s14
      %p145 = scmp.lt.s32.totalorder %s144, 15
      %s146 = scalar_select %p145, %s144, 15
      %s147 = smul.addr %s146, 8
      %s148 = scalar_lea.vmem %s0, %s147
      %p149 = pneg %p35
      %p150 = pneg %p32
      %p151 = pneg %p56
      %p152 = pneg %p53
      %p153 = pneg %p77
      %p154 = pneg %p74
      %p155 = pneg %p103
      %p156 = pneg %p100
      %s157 = smul.u32 32, %s14
      %p158 = scmp.lt.s32.totalorder %s157, 63
      %s159 = scalar_select %p158, %s157, 63
      %s160 = smul.addr %s159, 8
      %s161 = scalar_lea.vmem %s3, %s160
      %s162 = smul.u32 8, %s14
      %p163 = scmp.lt.s32.totalorder %s162, 15
      %s164 = scalar_select %p163, %s162, 15
      %s165 = smul.addr %s164, 8
      %s166 = scalar_lea.vmem %s0, %s165
      %s167 = smul.u32 8, %s14
      %s168 = smul.u32 32, %s14
      %p169 = scmp.lt.s32.totalorder %s168, 63
      %s170 = scalar_select %p169, %s168, 63
      %s171 = smul.addr %s170, 8
      %s172 = scalar_lea.vmem %s3, %s171
      %s173 = smul.u32 32, %s14
      %v174 = vld [vmem:[%s166] sm:$0xff]
      %v175 = vld [vmem:[%s166 + $0x8] sm:$0xff]
      %v176 = vld [vmem:[%s166 + $0x10] sm:$0xff]
      %v177 = vld [vmem:[%s166 + $0x18] sm:$0xff]
      %v178 = vld [vmem:[%s166 + $0x20] sm:$0xff]
      %v179 = vld [vmem:[%s166 + $0x28] sm:$0xff]
      %v180 = vld [vmem:[%s166 + $0x30] sm:$0xff]
      %v181 = vld [vmem:[%s166 + $0x38] sm:$0xff]
      %v182 = vld [vmem:[%s1] sm:$0xff]
      %v183 = vld [vmem:[%s1 + $0x8] sm:$0xff]
      %vm184 = vcmask 130048
      %v186 = vsel %vm184, %v174, 0
      %v189 = vsel %vm184, %v175, 0
      %v192 = vsel %vm184, %v176, 0
      %v195 = vsel %vm184, %v177, 0
      %v198 = vsel %vm184, %v178, 0
      %v201 = vsel %vm184, %v179, 0
      %v204 = vsel %vm184, %v180, 0
      %v207 = vsel %vm184, %v181, 0
      %209 = vmatprep.subr.mxu0 0.0
      %210 = vmatpush1.msra.mxu0 %v182
      %211 = vmatprep.subr.mxu0 0.0
      %212 = vmatpush1.msra.mxu0 %v183
      %213 = vmatprep.subr.mxu0 0.0
      %214 = vmatpush1.msra.mxu0 0.0
      %215 = vmatprep.subr.mxu0 0.0
      %216 = vmatpush1.msra.mxu0 0.0
      %217 = vmatprep.subr.mxu0 0.0
      %218 = vmatpush1.msra.mxu0 0.0
      %219 = vmatprep.subr.mxu0 0.0
      %220 = vmatpush1.msra.mxu0 0.0
      %221 = vmatprep.subr.mxu0 0.0
      %222 = vmatpush1.msra.mxu0 0.0
      %223 = vmatprep.subr.mxu0 0.0
      %224 = vmatpush1.msra.mxu0 0.0
      %225 = vmatprep.subr.mxu0 0.0
      %226 = vmatpush1.msra.mxu0 0.0
      %227 = vmatprep.subr.mxu0 0.0
      %228 = vmatpush1.msra.mxu0 0.0
      %229 = vmatprep.subr.mxu0 0.0
      %230 = vmatpush1.msra.mxu0 0.0
      %231 = vmatprep.subr.mxu0 0.0
      %232 = vmatpush1.msra.mxu0 0.0
      %233 = vmatprep.subr.mxu0 0.0
      %234 = vmatpush1.msra.mxu0 0.0
      %235 = vmatprep.subr.mxu0 0.0
      %236 = vmatpush1.msra.mxu0 0.0
      %237 = vmatprep.subr.mxu0 0.0
      %238 = vmatpush1.msra.mxu0 0.0
      %239 = vmatprep.subr.mxu0 0.0
      %240 = vmatpush1.msra.mxu0 0.0
      %241 = vmatprep.subr.mxu0 0.0
      %242 = vmatpush1.msra.mxu0 0.0
      %243 = vmatprep.subr.mxu0 0.0
      %244 = vmatpush1.msra.mxu0 0.0
      %245 = vmatprep.subr.mxu0 0.0
      %246 = vmatpush1.msra.mxu0 0.0
      %247 = vmatprep.subr.mxu0 0.0
      %248 = vmatpush1.msra.mxu0 0.0
      %249 = vmatprep.subr.mxu0 0.0
      %250 = vmatpush1.msra.mxu0 0.0
      %251 = vmatprep.subr.mxu0 0.0
      %252 = vmatpush1.msra.mxu0 0.0
      %253 = vmatprep.subr.mxu0 0.0
      %254 = vmatpush1.msra.mxu0 0.0
      %255 = vmatprep.subr.mxu0 0.0
      %256 = vmatpush1.msra.mxu0 0.0
      %257 = vmatprep.subr.mxu0 0.0
      %258 = vmatpush1.msra.mxu0 0.0
      %259 = vmatprep.subr.mxu0 0.0
      %260 = vmatpush1.msra.mxu0 0.0
      %261 = vmatprep.subr.mxu0 0.0
      %262 = vmatpush1.msra.mxu0 0.0
      %263 = vmatprep.subr.mxu0 0.0
      %264 = vmatpush1.msra.mxu0 0.0
      %265 = vmatprep.subr.mxu0 0.0
      %266 = vmatpush1.msra.mxu0 0.0
      %267 = vmatprep.subr.mxu0 0.0
      %268 = vmatpush1.msra.mxu0 0.0
      %269 = vmatprep.subr.mxu0 0.0
      %270 = vmatpush1.msra.mxu0 0.0
      %271 = vmatprep.subr.mxu0 0.0
      %272 = vmatpush1.msra.mxu0 0.0
      %273 = vmatprep.mubr.f32.mxu0 0.0
      %274 = vmatmul.mubr.f32.gmra.mrb[0].mxu0 %v186
      %v275 = vpop.f32.mrb[0].mxu0
      %v276 = vadd.f32 0.0, %v275
      %v277 = vpop.f32.mrb[0].mxu0
      %278 = vmatprep.mubr.f32.mxu0 0.0
      %279 = vmatmul.mubr.f32.gmra.mrb[0].mxu0 %v189
      %v280 = vpop.f32.mrb[0].mxu0
      %v281 = vadd.f32 0.0, %v280
      %v282 = vpop.f32.mrb[0].mxu0
      %283 = vmatprep.mubr.f32.mxu0 0.0
      %284 = vmatmul.mubr.f32.gmra.mrb[0].mxu0 %v192
      %v285 = vpop.f32.mrb[0].mxu0
      %v286 = vadd.f32 0.0, %v285
      %v287 = vpop.f32.mrb[0].mxu0
      %288 = vmatprep.mubr.f32.mxu0 0.0
      %289 = vmatmul.mubr.f32.gmra.mrb[0].mxu0 %v195
      %v290 = vpop.f32.mrb[0].mxu0
      %v291 = vadd.f32 0.0, %v290
      %v292 = vpop.f32.mrb[0].mxu0
      %293 = vmatprep.mubr.f32.mxu0 0.0
      %294 = vmatmul.mubr.f32.gmra.mrb[0].mxu0 %v198
      %v295 = vpop.f32.mrb[0].mxu0
      %v296 = vadd.f32 0.0, %v295
      %v297 = vpop.f32.mrb[0].mxu0
      %298 = vmatprep.mubr.f32.mxu0 0.0
      %299 = vmatmul.mubr.f32.gmra.mrb[0].mxu0 %v201
      %v300 = vpop.f32.mrb[0].mxu0
      %v301 = vadd.f32 0.0, %v300
      %v302 = vpop.f32.mrb[0].mxu0
      %303 = vmatprep.mubr.f32.mxu0 0.0
      %304 = vmatmul.mubr.f32.gmra.mrb[0].mxu0 %v204
      %v305 = vpop.f32.mrb[0].mxu0
      %v306 = vadd.f32 0.0, %v305
      %v307 = vpop.f32.mrb[0].mxu0
      %308 = vmatprep.mubr.f32.mxu0 0.0
      %309 = vmatmul.mubr.f32.gmra.mrb[0].mxu0 %v207
      %v310 = vpop.f32.mrb[0].mxu0
      %v311 = vadd.f32 0.0, %v310
      %v312 = vpop.f32.mrb[0].mxu0
      %313 = vdwg.mxu0
      %v314 = vld [vmem:[%s2] sm:$0xff]
      %v315 = vld [vmem:[%s2 + $0x8] sm:$0xff]
      %v316 = vld [vmem:[%s2 + $0x10] sm:$0xff]
      %v317 = vld [vmem:[%s2 + $0x18] sm:$0xff]
      %v318 = vld [vmem:[%s2 + $0x20] sm:$0xff]
      %v319 = vld [vmem:[%s2 + $0x28] sm:$0xff]
      %v320 = vld [vmem:[%s2 + $0x30] sm:$0xff]
      %v321 = vld [vmem:[%s2 + $0x38] sm:$0xff]
      %v322 = vld [vmem:[%s2 + $0x40] sm:$0xff]
      %v323 = vld [vmem:[%s2 + $0x48] sm:$0xff]
      %v324 = vld [vmem:[%s2 + $0x50] sm:$0xff]
      %v325 = vld [vmem:[%s2 + $0x58] sm:$0xff]
      %v326 = vld [vmem:[%s2 + $0x60] sm:$0xff]
      %v327 = vld [vmem:[%s2 + $0x68] sm:$0xff]
      %v328 = vld [vmem:[%s2 + $0x70] sm:$0xff]
      %v329 = vld [vmem:[%s2 + $0x78] sm:$0xff]
      %v330 = vld [vmem:[%s2 + $0x80] sm:$0xff]
      %v331 = vld [vmem:[%s2 + $0x88] sm:$0xff]
      %v332 = vld [vmem:[%s2 + $0x90] sm:$0xff]
      %v333 = vld [vmem:[%s2 + $0x98] sm:$0xff]
      %v334 = vld [vmem:[%s2 + $0xa0] sm:$0xff]
      %v335 = vld [vmem:[%s2 + $0xa8] sm:$0xff]
      %v336 = vld [vmem:[%s2 + $0xb0] sm:$0xff]
      %v337 = vld [vmem:[%s2 + $0xb8] sm:$0xff]
      %v338 = vld [vmem:[%s2 + $0xc0] sm:$0xff]
      %v339 = vld [vmem:[%s2 + $0xc8] sm:$0xff]
      %v340 = vld [vmem:[%s2 + $0xd0] sm:$0xff]
      %v341 = vld [vmem:[%s2 + $0xd8] sm:$0xff]
      %v342 = vld [vmem:[%s2 + $0xe0] sm:$0xff]
      %v343 = vld [vmem:[%s2 + $0xe8] sm:$0xff]
      %v344 = vld [vmem:[%s2 + $0xf0] sm:$0xff]
      %v345 = vld [vmem:[%s2 + $0xf8] sm:$0xff]
      %vm346 = vcmask 523264
      %v348 = vsel %vm346, %v314, 0
      %v351 = vsel %vm346, %v315, 0
      %v354 = vsel %vm346, %v316, 0
      %v357 = vsel %vm346, %v317, 0
      %v360 = vsel %vm346, %v318, 0
      %v363 = vsel %vm346, %v319, 0
      %v366 = vsel %vm346, %v320, 0
      %v369 = vsel %vm346, %v321, 0
      %v372 = vsel %vm346, %v322, 0
      %v375 = vsel %vm346, %v323, 0
      %v378 = vsel %vm346, %v324, 0
      %v381 = vsel %vm346, %v325, 0
      %v384 = vsel %vm346, %v326, 0
      %v387 = vsel %vm346, %v327, 0
      %v390 = vsel %vm346, %v328, 0
      %v393 = vsel %vm346, %v329, 0
      %v396 = vsel %vm346, %v330, 0
      %v399 = vsel %vm346, %v331, 0
      %v402 = vsel %vm346, %v332, 0
      %v405 = vsel %vm346, %v333, 0
      %v408 = vsel %vm346, %v334, 0
      %v411 = vsel %vm346, %v335, 0
      %v414 = vsel %vm346, %v336, 0
      %v417 = vsel %vm346, %v337, 0
      %v420 = vsel %vm346, %v338, 0
      %v423 = vsel %vm346, %v339, 0
      %v426 = vsel %vm346, %v340, 0
      %v429 = vsel %vm346, %v341, 0
      %v432 = vsel %vm346, %v342, 0
      %v435 = vsel %vm346, %v343, 0
      %v438 = vsel %vm346, %v344, 0
      %v441 = vsel %vm346, %v345, 0
      %443 = vmatprep.subr.mxu0 0.0
      %444 = vmatpush1.msra.mxu0 %v276
      %445 = vmatprep.subr.mxu0 0.0
      %446 = vmatpush1.msra.mxu0 %v281
      %447 = vmatprep.subr.mxu0 0.0
      %448 = vmatpush1.msra.mxu0 %v286
      %449 = vmatprep.subr.mxu0 0.0
      %450 = vmatpush1.msra.mxu0 %v291
      %451 = vmatprep.subr.mxu0 0.0
      %452 = vmatpush1.msra.mxu0 %v296
      %453 = vmatprep.subr.mxu0 0.0
      %454 = vmatpush1.msra.mxu0 %v301
      %455 = vmatprep.subr.mxu0 0.0
      %456 = vmatpush1.msra.mxu0 %v306
      %457 = vmatprep.subr.mxu0 0.0
      %458 = vmatpush1.msra.mxu0 %v311
      %459 = vmatprep.subr.mxu0 0.0
      %460 = vmatpush1.msra.mxu0 0.0
      %461 = vmatprep.subr.mxu0 0.0
      %462 = vmatpush1.msra.mxu0 0.0
      %463 = vmatprep.subr.mxu0 0.0
      %464 = vmatpush1.msra.mxu0 0.0
      %465 = vmatprep.subr.mxu0 0.0
      %466 = vmatpush1.msra.mxu0 0.0
      %467 = vmatprep.subr.mxu0 0.0
      %468 = vmatpush1.msra.mxu0 0.0
      %469 = vmatprep.subr.mxu0 0.0
      %470 = vmatpush1.msra.mxu0 0.0
      %471 = vmatprep.subr.mxu0 0.0
      %472 = vmatpush1.msra.mxu0 0.0
      %473 = vmatprep.subr.mxu0 0.0
      %474 = vmatpush1.msra.mxu0 0.0
      %475 = vmatprep.subr.mxu0 0.0
      %476 = vmatpush1.msra.mxu0 0.0
      %477 = vmatprep.subr.mxu0 0.0
      %478 = vmatpush1.msra.mxu0 0.0
      %479 = vmatprep.subr.mxu0 0.0
      %480 = vmatpush1.msra.mxu0 0.0
      %481 = vmatprep.subr.mxu0 0.0
      %482 = vmatpush1.msra.mxu0 0.0
      %483 = vmatprep.subr.mxu0 0.0
      %484 = vmatpush1.msra.mxu0 0.0
      %485 = vmatprep.subr.mxu0 0.0
      %486 = vmatpush1.msra.mxu0 0.0
      %487 = vmatprep.subr.mxu0 0.0
      %488 = vmatpush1.msra.mxu0 0.0
      %489 = vmatprep.subr.mxu0 0.0
      %490 = vmatpush1.msra.mxu0 0.0
      %491 = vmatprep.subr.mxu0 0.0
      %492 = vmatpush1.msra.mxu0 0.0
      %493 = vmatprep.subr.mxu0 0.0
      %494 = vmatpush1.msra.mxu0 0.0
      %495 = vmatprep.subr.mxu0 0.0
      %496 = vmatpush1.msra.mxu0 0.0
      %497 = vmatprep.subr.mxu0 0.0
      %498 = vmatpush1.msra.mxu0 0.0
      %499 = vmatprep.subr.mxu0 0.0
      %500 = vmatpush1.msra.mxu0 0.0
      %501 = vmatprep.subr.mxu0 0.0
      %502 = vmatpush1.msra.mxu0 0.0
      %503 = vmatprep.subr.mxu0 0.0
      %504 = vmatpush1.msra.mxu0 0.0
      %505 = vmatprep.subr.mxu0 0.0
      %506 = vmatpush1.msra.mxu0 0.0
      %507 = vmatprep.mubr.f32.mxu0 0.0
      %508 = vmatmul.mubr.f32.gmra.mrb[0].mxu0 %v348
      %v509 = vpop.f32.mrb[0].mxu0
      %v510 = vadd.f32 0.0, %v509
      %v511 = vpop.f32.mrb[0].mxu0
      %512 = vmatprep.mubr.f32.mxu0 0.0
      %513 = vmatmul.mubr.f32.gmra.mrb[0].mxu0 %v351
      %v514 = vpop.f32.mrb[0].mxu0
      %v515 = vadd.f32 0.0, %v514
      %v516 = vpop.f32.mrb[0].mxu0
      %517 = vmatprep.mubr.f32.mxu0 0.0
      %518 = vmatmul.mubr.f32.gmra.mrb[0].mxu0 %v354
      %v519 = vpop.f32.mrb[0].mxu0
      %v520 = vadd.f32 0.0, %v519
      %v521 = vpop.f32.mrb[0].mxu0
      %522 = vmatprep.mubr.f32.mxu0 0.0
      %523 = vmatmul.mubr.f32.gmra.mrb[0].mxu0 %v357
      %v524 = vpop.f32.mrb[0].mxu0
      %v525 = vadd.f32 0.0, %v524
      %v526 = vpop.f32.mrb[0].mxu0
      %527 = vmatprep.mubr.f32.mxu0 0.0
      %528 = vmatmul.mubr.f32.gmra.mrb[0].mxu0 %v360
      %v529 = vpop.f32.mrb[0].mxu0
      %v530 = vadd.f32 0.0, %v529
      %v531 = vpop.f32.mrb[0].mxu0
      %532 = vmatprep.mubr.f32.mxu0 0.0
      %533 = vmatmul.mubr.f32.gmra.mrb[0].mxu0 %v363
      %v534 = vpop.f32.mrb[0].mxu0
      %v535 = vadd.f32 0.0, %v534
      %v536 = vpop.f32.mrb[0].mxu0
      %537 = vmatprep.mubr.f32.mxu0 0.0
      %538 = vmatmul.mubr.f32.gmra.mrb[0].mxu0 %v366
      %v539 = vpop.f32.mrb[0].mxu0
      %v540 = vadd.f32 0.0, %v539
      %v541 = vpop.f32.mrb[0].mxu0
      %542 = vmatprep.mubr.f32.mxu0 0.0
      %543 = vmatmul.mubr.f32.gmra.mrb[0].mxu0 %v369
      %v544 = vpop.f32.mrb[0].mxu0
      %v545 = vadd.f32 0.0, %v544
      %v546 = vpop.f32.mrb[0].mxu0
      %547 = vmatprep.mubr.f32.mxu0 0.0
      %548 = vmatmul.mubr.f32.gmra.mrb[0].mxu0 %v372
      %v549 = vpop.f32.mrb[0].mxu0
      %v550 = vadd.f32 0.0, %v549
      %v551 = vpop.f32.mrb[0].mxu0
      %552 = vmatprep.mubr.f32.mxu0 0.0
      %553 = vmatmul.mubr.f32.gmra.mrb[0].mxu0 %v375
      %v554 = vpop.f32.mrb[0].mxu0
      %v555 = vadd.f32 0.0, %v554
      %v556 = vpop.f32.mrb[0].mxu0
      %557 = vmatprep.mubr.f32.mxu0 0.0
      %558 = vmatmul.mubr.f32.gmra.mrb[0].mxu0 %v378
      %v559 = vpop.f32.mrb[0].mxu0
      %v560 = vadd.f32 0.0, %v559
      %v561 = vpop.f32.mrb[0].mxu0
      %562 = vmatprep.mubr.f32.mxu0 0.0
      %563 = vmatmul.mubr.f32.gmra.mrb[0].mxu0 %v381
      %v564 = vpop.f32.mrb[0].mxu0
      %v565 = vadd.f32 0.0, %v564
      %v566 = vpop.f32.mrb[0].mxu0
      %567 = vmatprep.mubr.f32.mxu0 0.0
      %568 = vmatmul.mubr.f32.gmra.mrb[0].mxu0 %v384
      %v569 = vpop.f32.mrb[0].mxu0
      %v570 = vadd.f32 0.0, %v569
      %v571 = vpop.f32.mrb[0].mxu0
      %572 = vmatprep.mubr.f32.mxu0 0.0
      %573 = vmatmul.mubr.f32.gmra.mrb[0].mxu0 %v387
      %v574 = vpop.f32.mrb[0].mxu0
      %v575 = vadd.f32 0.0, %v574
      %v576 = vpop.f32.mrb[0].mxu0
      %577 = vmatprep.mubr.f32.mxu0 0.0
      %578 = vmatmul.mubr.f32.gmra.mrb[0].mxu0 %v390
      %v579 = vpop.f32.mrb[0].mxu0
      %v580 = vadd.f32 0.0, %v579
      %v581 = vpop.f32.mrb[0].mxu0
      %582 = vmatprep.mubr.f32.mxu0 0.0
      %583 = vmatmul.mubr.f32.gmra.mrb[0].mxu0 %v393
      %v584 = vpop.f32.mrb[0].mxu0
      %v585 = vadd.f32 0.0, %v584
      %v586 = vpop.f32.mrb[0].mxu0
      %587 = vmatprep.mubr.f32.mxu0 0.0
      %588 = vmatmul.mubr.f32.gmra.mrb[0].mxu0 %v396
      %v589 = vpop.f32.mrb[0].mxu0
      %v590 = vadd.f32 0.0, %v589
      %v591 = vpop.f32.mrb[0].mxu0
      %592 = vmatprep.mubr.f32.mxu0 0.0
      %593 = vmatmul.mubr.f32.gmra.mrb[0].mxu0 %v399
      %v594 = vpop.f32.mrb[0].mxu0
      %v595 = vadd.f32 0.0, %v594
      %v596 = vpop.f32.mrb[0].mxu0
      %597 = vmatprep.mubr.f32.mxu0 0.0
      %598 = vmatmul.mubr.f32.gmra.mrb[0].mxu0 %v402
      %v599 = vpop.f32.mrb[0].mxu0
      %v600 = vadd.f32 0.0, %v599
      %v601 = vpop.f32.mrb[0].mxu0
      %602 = vmatprep.mubr.f32.mxu0 0.0
      %603 = vmatmul.mubr.f32.gmra.mrb[0].mxu0 %v405
      %v604 = vpop.f32.mrb[0].mxu0
      %v605 = vadd.f32 0.0, %v604
      %v606 = vpop.f32.mrb[0].mxu0
      %607 = vmatprep.mubr.f32.mxu0 0.0
      %608 = vmatmul.mubr.f32.gmra.mrb[0].mxu0 %v408
      %v609 = vpop.f32.mrb[0].mxu0
      %v610 = vadd.f32 0.0, %v609
      %v611 = vpop.f32.mrb[0].mxu0
      %612 = vmatprep.mubr.f32.mxu0 0.0
      %613 = vmatmul.mubr.f32.gmra.mrb[0].mxu0 %v411
      %v614 = vpop.f32.mrb[0].mxu0
      %v615 = vadd.f32 0.0, %v614
      %v616 = vpop.f32.mrb[0].mxu0
      %617 = vmatprep.mubr.f32.mxu0 0.0
      %618 = vmatmul.mubr.f32.gmra.mrb[0].mxu0 %v414
      %v619 = vpop.f32.mrb[0].mxu0
      %v620 = vadd.f32 0.0, %v619
      %v621 = vpop.f32.mrb[0].mxu0
      %622 = vmatprep.mubr.f32.mxu0 0.0
      %623 = vmatmul.mubr.f32.gmra.mrb[0].mxu0 %v417
      %v624 = vpop.f32.mrb[0].mxu0
      %v625 = vadd.f32 0.0, %v624
      %v626 = vpop.f32.mrb[0].mxu0
      %627 = vmatprep.mubr.f32.mxu0 0.0
      %628 = vmatmul.mubr.f32.gmra.mrb[0].mxu0 %v420
      %v629 = vpop.f32.mrb[0].mxu0
      %v630 = vadd.f32 0.0, %v629
      %v631 = vpop.f32.mrb[0].mxu0
      %632 = vmatprep.mubr.f32.mxu0 0.0
      %633 = vmatmul.mubr.f32.gmra.mrb[0].mxu0 %v423
      %v634 = vpop.f32.mrb[0].mxu0
      %v635 = vadd.f32 0.0, %v634
      %v636 = vpop.f32.mrb[0].mxu0
      %637 = vmatprep.mubr.f32.mxu0 0.0
      %638 = vmatmul.mubr.f32.gmra.mrb[0].mxu0 %v426
      %v639 = vpop.f32.mrb[0].mxu0
      %v640 = vadd.f32 0.0, %v639
      %v641 = vpop.f32.mrb[0].mxu0
      %642 = vmatprep.mubr.f32.mxu0 0.0
      %643 = vmatmul.mubr.f32.gmra.mrb[0].mxu0 %v429
      %v644 = vpop.f32.mrb[0].mxu0
      %v645 = vadd.f32 0.0, %v644
      %v646 = vpop.f32.mrb[0].mxu0
      %647 = vmatprep.mubr.f32.mxu0 0.0
      %648 = vmatmul.mubr.f32.gmra.mrb[0].mxu0 %v432
      %v649 = vpop.f32.mrb[0].mxu0
      %v650 = vadd.f32 0.0, %v649
      %v651 = vpop.f32.mrb[0].mxu0
      %652 = vmatprep.mubr.f32.mxu0 0.0
      %653 = vmatmul.mubr.f32.gmra.mrb[0].mxu0 %v435
      %v654 = vpop.f32.mrb[0].mxu0
      %v655 = vadd.f32 0.0, %v654
      %v656 = vpop.f32.mrb[0].mxu0
      %657 = vmatprep.mubr.f32.mxu0 0.0
      %658 = vmatmul.mubr.f32.gmra.mrb[0].mxu0 %v438
      %v659 = vpop.f32.mrb[0].mxu0
      %v660 = vadd.f32 0.0, %v659
      %v661 = vpop.f32.mrb[0].mxu0
      %662 = vmatprep.mubr.f32.mxu0 0.0
      %663 = vmatmul.mubr.f32.gmra.mrb[0].mxu0 %v441
      %v664 = vpop.f32.mrb[0].mxu0
      %v665 = vadd.f32 0.0, %v664
      %v666 = vpop.f32.mrb[0].mxu0
      %667 = vdwg.mxu0
      %668 = vst.msk [vmem:[%s172] sm:$0xff] %vm346, %v510
      %669 = vst.msk [vmem:[%s172 + $0x8] sm:$0xff] %vm346, %v515
      %670 = vst.msk [vmem:[%s172 + $0x10] sm:$0xff] %vm346, %v520
      %671 = vst.msk [vmem:[%s172 + $0x18] sm:$0xff] %vm346, %v525
      %672 = vst.msk [vmem:[%s172 + $0x20] sm:$0xff] %vm346, %v530
      %673 = vst.msk [vmem:[%s172 + $0x28] sm:$0xff] %vm346, %v535
      %674 = vst.msk [vmem:[%s172 + $0x30] sm:$0xff] %vm346, %v540
      %675 = vst.msk [vmem:[%s172 + $0x38] sm:$0xff] %vm346, %v545
      %676 = vst.msk [vmem:[%s172 + $0x40] sm:$0xff] %vm346, %v550
      %677 = vst.msk [vmem:[%s172 + $0x48] sm:$0xff] %vm346, %v555
      %678 = vst.msk [vmem:[%s172 + $0x50] sm:$0xff] %vm346, %v560
      %679 = vst.msk [vmem:[%s172 + $0x58] sm:$0xff] %vm346, %v565
      %680 = vst.msk [vmem:[%s172 + $0x60] sm:$0xff] %vm346, %v570
      %681 = vst.msk [vmem:[%s172 + $0x68] sm:$0xff] %vm346, %v575
      %682 = vst.msk [vmem:[%s172 + $0x70] sm:$0xff] %vm346, %v580
      %683 = vst.msk [vmem:[%s172 + $0x78] sm:$0xff] %vm346, %v585
      %684 = vst.msk [vmem:[%s172 + $0x80] sm:$0xff] %vm346, %v590
      %685 = vst.msk [vmem:[%s172 + $0x88] sm:$0xff] %vm346, %v595
      %686 = vst.msk [vmem:[%s172 + $0x90] sm:$0xff] %vm346, %v600
      %687 = vst.msk [vmem:[%s172 + $0x98] sm:$0xff] %vm346, %v605
      %688 = vst.msk [vmem:[%s172 + $0xa0] sm:$0xff] %vm346, %v610
      %689 = vst.msk [vmem:[%s172 + $0xa8] sm:$0xff] %vm346, %v615
      %690 = vst.msk [vmem:[%s172 + $0xb0] sm:$0xff] %vm346, %v620
      %691 = vst.msk [vmem:[%s172 + $0xb8] sm:$0xff] %vm346, %v625
      %692 = vst.msk [vmem:[%s172 + $0xc0] sm:$0xff] %vm346, %v630
      %693 = vst.msk [vmem:[%s172 + $0xc8] sm:$0xff] %vm346, %v635
      %694 = vst.msk [vmem:[%s172 + $0xd0] sm:$0xff] %vm346, %v640
      %695 = vst.msk [vmem:[%s172 + $0xd8] sm:$0xff] %vm346, %v645
      %696 = vst.msk [vmem:[%s172 + $0xe0] sm:$0xff] %vm346, %v650
      %697 = vst.msk [vmem:[%s172 + $0xe8] sm:$0xff] %vm346, %v655
      %698 = vst.msk [vmem:[%s172 + $0xf0] sm:$0xff] %vm346, %v660
      %699 = vst.msk [vmem:[%s172 + $0xf8] sm:$0xff] %vm346, %v665
      %s700 = smul.u32 32, %s14
      %p701 = scmp.lt.s32.totalorder %s700, 63
      %s702 = scalar_select %p701, %s700, 63
      %s703 = smul.addr %s702, 8
      %s704 = scalar_lea.vmem %s3, %s703
      // Predicated region
      $region33: #{tpu_custom_call.1} parent=31 // pred_check
        %p705 = pneg %p100
      $region34: #{tpu_custom_call.1} parent=31 // pred_check_branch
        %707 = sbr.rel (%p705) target = $region36
      $region35: #{tpu_custom_call.1} parent=31 // pred_region
        %s708 = smul.u32 32, %s14
      $region36: #{tpu_custom_call.1} parent=31 // pred_fallthru
        _
    $region32: #{tpu_custom_call.1} parent=5 // pred_fallthru
      _
    %p709 = scmp.le.s32.totalorder 2, %s9
    // Predicated region
    $region37: #{tpu_custom_call.1} parent=5 // pred_check
      %p710 = pneg %p709
    $region38: #{tpu_custom_call.1} parent=5 // pred_check_branch
      %712 = sbr.rel (%p710) target = $region40
    $region39: #{tpu_custom_call.1} parent=5 // pred_region
      %s713 = ssub.s32 %s9, 2
      // Predicated region
      $region41: #{tpu_custom_call.1} parent=39 // pred_check
        %p714 = pneg %p106
      $region42: #{tpu_custom_call.1} parent=39 // pred_check_branch
        %716 = sbr.rel (%p714) target = $region44
      $region43: #{tpu_custom_call.1} parent=39 // pred_region
        %s717 = smul.u32 32, %s15
        %p718 = scmp.lt.s32.totalorder %s717, 63
        %s719 = scalar_select %p718, %s717, 63
        %s720 = smul.addr %s719, 8
        %s721 = scalar_lea.vmem %s3, %s720
      $region44: #{tpu_custom_call.1} parent=39 // pred_fallthru
        _
    $region40: #{tpu_custom_call.1} parent=5 // pred_fallthru
      _
  $region6: #{tpu_custom_call.1} parent=0 // loop_footer
    %s13 = sadd.s32 1, %s9
  $region7: #{tpu_custom_call.1} parent=0 // loop_footer_branch
    %8 = sbr.rel target = $region3
  $region8: #{tpu_custom_call.1} parent=0 // loop_exit
    _

</llo_original>
